<compile_context>
chip_gen: v7x
topology: tpu7x:2x2x1
jax: 0.10.0
libtpu: 0.0.40
codegen_flags: <defaults>
</compile_context>

<pallas_src>
import functools
import math

import jax
import jax.numpy as jnp
from jax import lax
from jax.experimental import pallas as pl
from jax.experimental.pallas import tpu as pltpu


def gaussian_taps_1d(kernel_size: int, sigma: float):
    """Normalized 1-D Gaussian taps as Python floats.

    outer(w, w) equals the PyTorch module's 2-D buffer because the joint
    normalization factorizes (sum(outer(g, g)) == sum(g)**2).
    """
    mean = (kernel_size - 1) / 2.0
    g = [
        math.exp(-(((i - mean) / sigma) ** 2) / 2.0)
        / (sigma * math.sqrt(2.0 * math.pi))
        for i in range(kernel_size)
    ]
    s = sum(g)
    return tuple(float(v / s) for v in g)


def _smooth_kernel(x_ref, o_ref, *, taps, h_out):
    """Separable Gaussian on one lane-dense tile.

    x_ref: (h_out + K - 1, lanes) f32.   o_ref: (h_out, w_out) f32, w_out <= lanes.
    Taps are Python float immediates.  Vertical pass reads row slices straight
    from the ref; horizontal pass is K-1 XLU lane rolls on the accumulator.
    """
    k = len(taps)
    lanes = x_ref.shape[-1]
    w_out = o_ref.shape[-1]

    # Vertical 1-D pass: ref-side row-offset loads -> (h_out, lanes) accumulator.
    acc = taps[0] * x_ref[0:h_out, :]
    for i in range(1, k):
        acc = acc + taps[i] * x_ref[i:i + h_out, :]

    # Horizontal 1-D pass: roll(acc, lanes - j) gives r[:, l] == acc[:, (l+j) % lanes].
    # Only the last K-1 columns of each W-lane plane read across a plane (or
    # wrap) boundary; those columns are sliced off here or by the wrapper.
    out = taps[0] * acc
    for j in range(1, k):
        out = out + taps[j] * pltpu.roll(acc, shift=lanes - j, axis=1)

    if w_out != lanes:
        out = out[:, :w_out]
    o_ref[...] = out.astype(o_ref.dtype)


def _vmem_budgets():
    """Generation-aware (per-block byte budget, scoped VMEM limit)."""
    try:
        info = pltpu.get_tpu_info()
        vmem_cap = getattr(info, "vmem_capacity_bytes", None)
    except Exception:
        vmem_cap = None
    if vmem_cap is None:
        # Conservative defaults that work on every generation.
        return 4 * 1024 * 1024, 32 * 1024 * 1024
    if vmem_cap <= 64 * 1024 * 1024:
        # v7x: 64 MiB per TensorCore, 2 TCs -> smaller blocks, modest limit.
        limit = min(48 * 1024 * 1024, (3 * vmem_cap) // 4)
        return max(1 << 20, vmem_cap // 32), limit
    # v5e / v6e: 128 MiB -> larger lane tiles amortize per-step overhead.
    return 8 * 1024 * 1024, 64 * 1024 * 1024


def _lcm(a, b):
    return a * b // math.gcd(a, b)


def gaussian_smoothing(x, kernel_size, sigma):
    """Depthwise VALID conv2d of NCHW `x` with a separable Gaussian kernel."""
    taps = gaussian_taps_1d(kernel_size, sigma)
    K = kernel_size
    N, C, H, W = x.shape
    assert H >= K and W >= K, "Gaussian kernel larger than the image"
    H_out, W_out = H - K + 1, W - K + 1
    P = N * C
    itemsize = x.dtype.itemsize

    block_budget, vmem_limit = _vmem_budgets()
    kernel = functools.partial(_smooth_kernel, taps=taps, h_out=H_out)
    cparams = pltpu.CompilerParams(
        dimension_semantics=("parallel",),
        vmem_limit_bytes=vmem_limit,
    )

    # ---- Fast NCHW path: W already lane-dense -> no host pack/unpack transposes.
    if W % 128 == 0 and H * W * itemsize * 4 <= vmem_limit:
        # TODO(synk): tile H (with a K-1 row halo) / W for planes too large to
        # hold whole in VMEM; unnecessary at these sizes.
        x3 = x.reshape(P, H, W)  # free reshape, no transpose
        out3 = pl.pallas_call(
            kernel,
            out_shape=jax.ShapeDtypeStruct((P, H_out, W_out), x.dtype),
            grid_spec=pltpu.PrefetchScalarGridSpec(
                num_scalar_prefetch=0,
                grid=(P,),
                in_specs=[pl.BlockSpec((None, H, W), lambda p: (p, 0, 0))],
                out_specs=pl.BlockSpec((None, H_out, W_out), lambda p: (p, 0, 0)),
            ),
            compiler_params=cparams,
        )(x3)
        return out3.reshape(N, C, H_out, W_out)

    # ---- Lane-packed path (small / awkward W): pack all N*C planes onto the
    # lane axis as one lane-dense slab of shape (H, P*W).
    g = _lcm(W, 128)              # smallest lane-dense, plane-aligned tile width
    L = P * W
    total_bytes = H * L * itemsize

    # Tile width: largest multiple of g inside the per-block budget, but keep
    # >= ~4 grid steps once the slab is big enough to pipeline / megacore-shard.
    m_budget = max(1, block_budget // (H * g * itemsize))
    target_tiles = 4 if total_bytes > (1 << 20) else 1
    m_target = max(1, -(-L // (g * target_tiles)))
    m = max(1, min(m_budget, m_target))
    Lt = g * m
    n_tiles = -(-L // Lt)
    L_pad = n_tiles * Lt
    P_pad = L_pad // W

    # Pack (zero-padding extra planes so every tile is lane-dense).  Each
    # plane's W lanes stay contiguous inside a tile (Lt % W == 0), so the roll
    # wraparound only contaminates the K-1 columns discarded below.
    x3 = x.reshape(P, H, W)
    if P_pad > P:
        x3 = jnp.pad(x3, ((0, P_pad - P), (0, 0), (0, 0)))
    x_packed = x3.transpose(1, 0, 2).reshape(H, L_pad)

    out_packed = pl.pallas_call(
        kernel,
        out_shape=jax.ShapeDtypeStruct((H_out, L_pad), x.dtype),
        grid_spec=pltpu.PrefetchScalarGridSpec(
            num_scalar_prefetch=0,
            grid=(n_tiles,),
            in_specs=[pl.BlockSpec((H, Lt), lambda t: (0, t))],
            out_specs=pl.BlockSpec((H_out, Lt), lambda t: (0, t)),
        ),
        compiler_params=cparams,
    )(x_packed)

    out = (out_packed.reshape(H_out, P_pad, W)[:, :P, :W_out]
           .transpose(1, 0, 2)
           .reshape(N, C, H_out, W_out))
    return out


def _reference(x, taps):
    """Depthwise VALID conv with the full 2-D Gaussian buffer (as in PyTorch)."""
    K = len(taps)
    C = x.shape[1]
    w1 = jnp.asarray(taps, dtype=jnp.float32)
    w2 = jnp.outer(w1, w1)
    w4 = jnp.broadcast_to(w2, (C, 1, K, K))
    return lax.conv_general_dilated(
        x, w4, window_strides=(1, 1), padding="VALID",
        dimension_numbers=("NCHW", "OIHW", "NCHW"),
        feature_group_count=C,
        precision=lax.Precision.HIGHEST,
    )


if __name__ == "__main__":
    # Module config: channels=4, kernel_size=3, sigma=1.0, dim=2
    channels, kernel_size, sigma = 4, 3, 1.0
    N, H, W = 2, 16, 16

    key = jax.random.PRNGKey(0)
    x = jax.random.normal(key, (N, channels, H, W), dtype=jnp.float32)

    out = jax.block_until_ready(gaussian_smoothing(x, kernel_size, sigma))
    ref = _reference(x, gaussian_taps_1d(kernel_size, sigma))
    assert out.shape == (N, channels, H - kernel_size + 1, W - kernel_size + 1)
    assert jnp.allclose(out, ref, atol=1e-5, rtol=1e-5)

    # Also exercise the lane-dense NCHW fast path (no pack/unpack transposes).
    x2 = jax.random.normal(jax.random.PRNGKey(0), (1, 2, 12, 128), dtype=jnp.float32)
    out2 = jax.block_until_ready(gaussian_smoothing(x2, kernel_size, sigma))
    ref2 = _reference(x2, gaussian_taps_1d(kernel_size, sigma))
    assert out2.shape == (1, 2, 12 - kernel_size + 1, 128 - kernel_size + 1)
    assert jnp.allclose(out2, ref2, atol=1e-5, rtol=1e-5)

    print("KERNEL_OK")
</pallas_src>

<mosaic_0001>
module attributes {stable_mosaic.version = 11 : i64} {
  func.func @_smooth_kernel(%arg0: i32, %arg1: memref<16x128xf32, #tpu.memory_space<vmem>>, %arg2: memref<14x128xf32, #tpu.memory_space<vmem>>) attributes {dimension_semantics = [#tpu.dimension_semantics<parallel>], iteration_bounds = array<i64: 1>, scalar_prefetch = 0 : i64, scratch_operands = 0 : i64, tpu.core_type = #tpu.core_type<tc>, window_params = [{transform_indices = @transform_0, window_bounds = array<i64: 16, 128>}, {transform_indices = @transform_1, window_bounds = array<i64: 14, 128>}]} {
    %c0 = arith.constant 0 : index
    %c0_0 = arith.constant 0 : index
    %0 = vector.load %arg1[%c0, %c0_0] : memref<16x128xf32, #tpu.memory_space<vmem>>, vector<14x128xf32>
    %cst = arith.constant 0.274068624 : f32
    %1 = vector.broadcast %cst : f32 to vector<14x128xf32>
    %2 = arith.mulf %1, %0 : vector<14x128xf32>
    %c1 = arith.constant 1 : index
    %c0_1 = arith.constant 0 : index
    %3 = vector.load %arg1[%c1, %c0_1] : memref<16x128xf32, #tpu.memory_space<vmem>>, vector<14x128xf32>
    %cst_2 = arith.constant 0.451862752 : f32
    %4 = vector.broadcast %cst_2 : f32 to vector<14x128xf32>
    %5 = arith.mulf %4, %3 : vector<14x128xf32>
    %6 = arith.addf %2, %5 : vector<14x128xf32>
    %c2 = arith.constant 2 : index
    %c0_3 = arith.constant 0 : index
    %7 = vector.load %arg1[%c2, %c0_3] : memref<16x128xf32, #tpu.memory_space<vmem>>, vector<14x128xf32>
    %cst_4 = arith.constant 0.274068624 : f32
    %8 = vector.broadcast %cst_4 : f32 to vector<14x128xf32>
    %9 = arith.mulf %8, %7 : vector<14x128xf32>
    %10 = arith.addf %6, %9 : vector<14x128xf32>
    %cst_5 = arith.constant 0.274068624 : f32
    %11 = vector.broadcast %cst_5 : f32 to vector<14x128xf32>
    %12 = arith.mulf %11, %10 : vector<14x128xf32>
    %c127_i32 = arith.constant 127 : i32
    %13 = tpu.dynamic_rotate %10 by %c127_i32 dim 1 : vector<14x128xf32>, i32 -> vector<14x128xf32>
    %cst_6 = arith.constant 0.451862752 : f32
    %14 = vector.broadcast %cst_6 : f32 to vector<14x128xf32>
    %15 = arith.mulf %14, %13 : vector<14x128xf32>
    %16 = arith.addf %12, %15 : vector<14x128xf32>
    %c126_i32 = arith.constant 126 : i32
    %17 = tpu.dynamic_rotate %10 by %c126_i32 dim 1 : vector<14x128xf32>, i32 -> vector<14x128xf32>
    %cst_7 = arith.constant 0.274068624 : f32
    %18 = vector.broadcast %cst_7 : f32 to vector<14x128xf32>
    %19 = arith.mulf %18, %17 : vector<14x128xf32>
    %20 = arith.addf %16, %19 : vector<14x128xf32>
    %c0_8 = arith.constant 0 : index
    %c0_9 = arith.constant 0 : index
    %21 = vector.load %arg2[%c0_8, %c0_9] : memref<14x128xf32, #tpu.memory_space<vmem>>, vector<14x128xf32>
    tpu.vector_store %arg2[%c0_8, %c0_9], %20 {strides = array<i32>} : memref<14x128xf32, #tpu.memory_space<vmem>>, vector<14x128xf32>,
    return
  }
  func.func @transform_0(%arg0: i32) -> (i32, i32) {
    %c0_i32 = arith.constant 0 : i32
    %c0_i32_0 = arith.constant 0 : i32
    return %c0_i32, %arg0 : i32, i32
  }
  func.func @transform_1(%arg0: i32) -> (i32, i32) {
    %c0_i32 = arith.constant 0 : i32
    %c0_i32_0 = arith.constant 0 : i32
    return %c0_i32, %arg0 : i32, i32
  }
}

</mosaic_0001>

<llo_original>
// kernel: tpu_custom_call.1
$region0: #{tpu_custom_call.1}
  #allocation0 [shape = 'u32[]', space=smem, size = 0x4, offset = 0x4, fixed_abs, tag = 'smem constant byte address 0x4 - core index']
  #allocation1 [shape = 'u32[144,128]{1,0:T(1,128)}', space=vmem, size = 0x12000, scoped, tag = 'internal scratch']
  %s0 = inlined_call_operand.hbm [shape: f32[16,128], index: 0, kind: input, shape index: {}]
  %s1 = inlined_call_operand.hbm [shape: f32[14,128], index: 1, kind: output, shape index: {}]
  %s2 = sld [smem:[#allocation0]]
  $region18: #{tpu_custom_call.1} parent=0
    _
  %s4 = ssub.s32 1, %s2
  %s5 = scalar_select 0, %s4, %s2
  $region1: #{tpu_custom_call.1} parent=0
    #allocation2 [shape = 'u8[8192]{0}', space=vmem, size = 0x2000, scoped, tag = 'input window, operand 0, single buffered']
    #allocation3 [shape = 's32[1]{0}', space=sflag, size = 0x4, scoped, tag = 'scoped memory for tpu_custom_call.1']
    #allocation4 [shape = 's32[1]{0}', space=sflag, size = 0x4, scoped, tag = 'scoped memory for tpu_custom_call.1']
    #allocation5 [shape = 'u8[8192]{0}', space=vmem, size = 0x2000, scoped, tag = 'output window, operand 0, single buffered']
    %6 = vsyncpa [#allocation3], 0
    %7 = vsyncpa [#allocation4], 0
    // Predicated region
    $region2: #{tpu_custom_call.1} parent=1 // pred_check
      _
    $region3: #{tpu_custom_call.1} parent=1 // pred_check_branch
      %9 = sbr.rel (0) target = $region5
    $region4: #{tpu_custom_call.1} parent=1 // pred_region
      %s11 = ssub.s32 256, 256
      %12 = vsyncadd [#allocation3], %s11
      %s13 = sshll.u32 [#allocation2], 4
      %s14 = int_to_ptr.vmem [resolvable:$true] %s13
      %19 = dma.hbm_to_vmem [thread:$0]  %s0, 256, %s14, [#allocation3], 128, 128, 8
    $region5: #{tpu_custom_call.1} parent=1 // pred_fallthru
      _
    // Predicated region
    $region6: #{tpu_custom_call.1} parent=1 // pred_check
      _
    $region7: #{tpu_custom_call.1} parent=1 // pred_check_branch
      %21 = sbr.rel (0) target = $region9
    $region8: #{tpu_custom_call.1} parent=1 // pred_region
      %22 = dma.done [#allocation3], 256
    $region9: #{tpu_custom_call.1} parent=1 // pred_fallthru
      _
    %v23 = vld [vmem:[#allocation2] sm:$0xff]
    %v24 = vld [vmem:[#allocation2 + $0x8] sm:$0x3f]
    %v25 = vmul.f32 %v23, 0.27406862
    %v26 = vmul.f32 %v24, 0.27406862
    %v27 = vld [vmem:[#allocation2 + $0x1] sm:$0xff]
    %v28 = vld [vmem:[#allocation2 + $0x9] sm:$0x3f]
    %v29 = vmul.f32 %v27, 0.45186275
    %v30 = vmul.f32 %v28, 0.45186275
    %v31 = vadd.f32 %v25, %v29
    %v32 = vadd.f32 %v26, %v30
    %v33 = vld [vmem:[#allocation2 + $0x2] sm:$0xff]
    %v34 = vld [vmem:[#allocation2 + $0xa] sm:$0x3f]
    %v35 = vmul.f32 %v33, 0.27406862
    %v36 = vmul.f32 %v34, 0.27406862
    %v37 = vadd.f32 %v31, %v35
    %v38 = vadd.f32 %v32, %v36
    %v39 = vmul.f32 %v37, 0.27406862
    %v40 = vmul.f32 %v38, 0.27406862
    %41 = vrot.lane.b32.xlu0 %v37, 127
    %v42 = vpop.permute.xlu0 %41
    %43 = vrot.lane.b32.xlu0 %v38, 127
    %v44 = vpop.permute.xlu0 %43
    %v45 = vmul.f32 %v42, 0.45186275
    %v46 = vmul.f32 %v44, 0.45186275
    %v47 = vadd.f32 %v39, %v45
    %v48 = vadd.f32 %v40, %v46
    %49 = vrot.lane.b32.xlu0 %v37, 126
    %v50 = vpop.permute.xlu0 %49
    %51 = vrot.lane.b32.xlu0 %v38, 126
    %v52 = vpop.permute.xlu0 %51
    %v53 = vmul.f32 %v50, 0.27406862
    %v54 = vmul.f32 %v52, 0.27406862
    %v55 = vadd.f32 %v47, %v53
    %v56 = vadd.f32 %v48, %v54
    %57 = vst [vmem:[#allocation5] sm:$0xff] %v55
    %58 = vst [vmem:[#allocation5 + $0x8] sm:$0x3f] %v56
    // Predicated region
    $region10: #{tpu_custom_call.1} parent=1 // pred_check
      _
    $region11: #{tpu_custom_call.1} parent=1 // pred_check_branch
      %60 = sbr.rel (0) target = $region13
    $region12: #{tpu_custom_call.1} parent=1 // pred_region
      %s62 = ssub.s32 256, 256
      %63 = vsyncadd [#allocation4], %s62
      %s64 = sshll.u32 [#allocation5], 4
      %s65 = int_to_ptr.vmem [resolvable:$true] %s64
      %70 = dma.vmem_to_hbm [thread:$0]  %s65, 256, %s1, [#allocation4], 128, 128, 8
    $region13: #{tpu_custom_call.1} parent=1 // pred_fallthru
      _
    // Predicated region
    $region14: #{tpu_custom_call.1} parent=1 // pred_check
      _
    $region15: #{tpu_custom_call.1} parent=1 // pred_check_branch
      %72 = sbr.rel (0) target = $region17
    $region16: #{tpu_custom_call.1} parent=1 // pred_region
      %73 = dma.done [#allocation4], 256
    $region17: #{tpu_custom_call.1} parent=1 // pred_fallthru
      _
    %74 = vsyncpa [#allocation3], 1
    %75 = vsyncpa [#allocation4], 1

</llo_original>
